<compile_context>
chip_gen: v6e
topology: v6e:2x2x1
jax: 0.10.0
libtpu: 0.0.40
codegen_flags: <defaults>
</compile_context>

<pallas_src>
import functools

import numpy as np
import jax
import jax.numpy as jnp
from jax.experimental import pallas as pl
from jax.experimental.pallas import tpu as pltpu


# --------------------------------------------------------------------------- host-side matrices
def _upsample_matrix(n_in):
    """(2*n_in, n_in) matrix implementing torch bilinear x2, align_corners=False."""
    n_out = 2 * n_in
    dst = np.arange(n_out, dtype=np.float64)
    src = np.maximum((dst + 0.5) * 0.5 - 0.5, 0.0)          # torch clamps negative src to 0
    i0 = np.minimum(np.floor(src).astype(np.int64), n_in - 1)
    i1 = np.minimum(i0 + 1, n_in - 1)
    frac = src - i0
    m = np.zeros((n_out, n_in), dtype=np.float64)
    m[np.arange(n_out), i0] += 1.0 - frac
    m[np.arange(n_out), i1] += frac
    return m


def _shift_rows(m, d):
    """out[p] = m[p + d] if in range else 0  (zero-padding for the conv taps)."""
    r = m.shape[0]
    s = np.zeros_like(m)
    lo, hi = max(0, -d), min(r, r - d)
    s[lo:hi] = m[lo + d:hi + d]
    return s


def _tensorcores_per_chip():
    """Best-effort TensorCores-per-chip query (2 on v7x, 1 on v5e/v6e).

    Only used to decide whether a 2-way parallel batch split is worth an extra grid step.
    If the query fails we fall back to 1, which is correct on every chip (we merely skip
    the dual-TC split).  Note: this does NOT wrap the pallas_call, so it cannot mask
    lowering / runtime errors of the kernel itself.
    """
    try:
        info = pltpu.get_tpu_info()
    except Exception:                       # old jax or query unsupported in this context
        return 1
    for name in ("num_cores", "num_tensorcores", "tensor_cores_per_chip", "cores_per_chip"):
        v = getattr(info, name, None)
        if isinstance(v, int) and v > 0:
            return v
    return 1


# --------------------------------------------------------------------------- Pallas kernel
def _upsample_conv_kernel(x_ref, uwt_ref, gcat_ref, bias_ref, o_ref, *, taps, bn):
    """One batch block, natural NCHW layout (no transposes anywhere).

    x_ref    : (bn, C*H, W)       f32   x[n] flattened row-major: row = ci*H + h, col = w
    uwt_ref  : (taps, W, 2W)      bf16  shift_rows(UW, kw-1)^T             (grid-invariant)
    gcat_ref : (C*2H, taps*C*H)   f32   [Gsum0 | Gsum1 | Gsum2]            (grid-invariant)
    bias_ref : (C*2H, 1)          f32   conv bias repeated over p          (grid-invariant)
    o_ref    : (bn, C*2H, 2W)     f32   out[n] flattened row-major: row = co*2H + p, col = q
    """
    gcat = gcat_ref[...]                                   # hoisted: one load per grid step
    bias = bias_ref[...]
    for b in range(bn):                                    # static unroll (bn is 1 or 2)
        xb = x_ref[b].astype(jnp.bfloat16)                 # (C*H, W)
        # Stage 1: W-direction bilinear x2 with the conv kw-tap shift folded in,
        #          one small matmul per tap, f32 accumulation on the MXU.
        t = [jnp.dot(xb, uwt_ref[kw], preferred_element_type=jnp.float32)
             for kw in range(taps)]                        # each (C*H, 2W)
        # Stack the taps along the contraction (sublane) axis -> single K = taps*C*H.
        tcat = t[0] if taps == 1 else jnp.concatenate(t, axis=0)   # (taps*C*H, 2W)
        # Stage 2: ONE fused matmul: H-upsample + all kh conv taps + channel mix (+ bias).
        out = jnp.dot(gcat, tcat, preferred_element_type=jnp.float32)   # (C*2H, 2W)
        o_ref[b] = (out + bias).astype(o_ref.dtype)


# --------------------------------------------------------------------------- pallas_call builder
def _pallas_forward(x_flat, uwt, gcat, bias_col, *, taps, bn, n_blocks):
    n, ch, w = map(int, x_flat.shape)
    c2h = int(gcat.shape[0])
    w2 = 2 * w

    # True resident set (double-buffered), plus generous headroom — a few hundred KB here,
    # clamped to [2 MiB, 16 MiB] so we never starve co-scheduled XLA fusions (v7x: 64 MiB VMEM).
    resident = (2 * bn * ch * w * 4          # x blocks (f32)
                + 2 * bn * c2h * w2 * 4      # out blocks (f32)
                + 2 * taps * w * w2 * 2      # uwt (bf16)
                + 2 * c2h * taps * ch * 4    # gcat (f32)
                + 2 * c2h * 4)               # bias
    vmem_limit = int(min(16 << 20, max(2 << 20, 4 * resident)))

    kernel = functools.partial(_upsample_conv_kernel, taps=taps, bn=bn)
    return pl.pallas_call(
        kernel,
        out_shape=jax.ShapeDtypeStruct((n, c2h, w2), jnp.float32),
        grid=(n_blocks,),
        in_specs=[
            pl.BlockSpec((bn, ch, w), lambda i: (i, 0, 0)),       # per-step batch slice
            pl.BlockSpec((taps, w, w2), lambda i: (0, 0, 0)),     # grid-invariant (fetched once)
            pl.BlockSpec((c2h, taps * ch), lambda i: (0, 0)),     # grid-invariant
            pl.BlockSpec((c2h, 1), lambda i: (0, 0)),             # grid-invariant
        ],
        out_specs=pl.BlockSpec((bn, c2h, w2), lambda i: (i, 0, 0)),
        compiler_params=pltpu.CompilerParams(
            dimension_semantics=("parallel",),        # 2 batch blocks -> both v7x TensorCores
            vmem_limit_bytes=vmem_limit),
    )(x_flat, uwt, gcat, bias_col)


# --------------------------------------------------------------------------- wrapper
def upsample_block_forward(x_nchw, conv_w=None, conv_b=None, *, with_conv=True):
    """x_nchw: (N, C, H, W) float32; conv_w: (C, C, 3, 3); conv_b: (C,)."""
    n, c, h, w = map(int, x_nchw.shape)
    uh = _upsample_matrix(h)                                  # (2H, H)
    uw = _upsample_matrix(w)                                  # (2W, W)

    if with_conv:
        taps = 3
        wnp = np.asarray(conv_w, dtype=np.float64)            # (Cout, Cin, 3, 3)
        # kh sum folded on the host (exact): Gsum[kw] : (C*2H, C*H)
        gsum = [sum(np.kron(wnp[:, :, kh, kw], _shift_rows(uh, kh - 1)) for kh in range(3))
                for kw in range(3)]
        uwt = [_shift_rows(uw, kw - 1).T for kw in range(3)]  # each (W, 2W)
        bias = np.asarray(conv_b, dtype=np.float64)
    else:
        taps = 1
        gsum = [np.kron(np.eye(c), uh)]                       # (C*2H, C*H)
        uwt = [uw.T]
        bias = np.zeros((c,), dtype=np.float64)

    # Single fused stage-2 weight: K = taps*C*H (review fix #1).
    gcat = np.concatenate(gsum, axis=1)                       # (C*2H, taps*C*H)
    uwt = np.stack(uwt)                                       # (taps, W, 2W)
    bias_col = np.repeat(bias, 2 * h).reshape(c * 2 * h, 1)   # (C*2H, 1)

    # Natural NCHW layout end-to-end: both reshapes are free row-major views (no transposes,
    # no extra XLA kernels / HBM passes — review fix #7).
    x_flat = jnp.reshape(x_nchw, (n, c * h, w))

    # Batch in the grid (review fix #2); split into 2 parallel blocks only on dual-TC chips
    # (review fix #3 — single step on v5e/v6e avoids duplicated per-step overhead).
    n_blocks = 2 if (n >= 2 and n % 2 == 0 and _tensorcores_per_chip() >= 2) else 1
    bn = n // n_blocks

    out_flat = _pallas_forward(
        x_flat,
        jnp.asarray(uwt, jnp.bfloat16),     # bilinear/tap weights are exactly representable
        jnp.asarray(gcat, jnp.float32),     # stage-2 weights kept f32 (tighter numerics, cheap)
        jnp.asarray(bias_col, jnp.float32),
        taps=taps, bn=bn, n_blocks=n_blocks)

    return jnp.reshape(out_flat, (n, c, 2 * h, 2 * w))        # free view


# --------------------------------------------------------------------------- independent reference
def _ref_upsample_bilinear2x(x):
    def up_axis(a, axis):
        n_in = a.shape[axis]
        dst = np.arange(2 * n_in)
        src = np.maximum((dst + 0.5) * 0.5 - 0.5, 0.0)
        i0 = np.minimum(np.floor(src).astype(np.int32), n_in - 1)
        i1 = np.minimum(i0 + 1, n_in - 1)
        frac = (src - i0).astype(np.float32)
        a0 = jnp.take(a, jnp.asarray(i0), axis=axis)
        a1 = jnp.take(a, jnp.asarray(i1), axis=axis)
        shape = [1] * a.ndim
        shape[axis] = 2 * n_in
        f = jnp.asarray(frac).reshape(shape)
        return a0 * (1.0 - f) + a1 * f
    return up_axis(up_axis(x, 2), 3)


def _ref_forward(x, conv_w, conv_b, with_conv):
    u = _ref_upsample_bilinear2x(x)
    if not with_conv:
        return u
    out = jax.lax.conv_general_dilated(
        u, conv_w, window_strides=(1, 1), padding=((1, 1), (1, 1)),
        dimension_numbers=("NCHW", "OIHW", "NCHW"),
        precision=jax.lax.Precision.HIGHEST)
    return out + conv_b[None, :, None, None]


# --------------------------------------------------------------------------- main
if __name__ == "__main__":
    N, C, H, W = 2, 4, 16, 16
    key = jax.random.PRNGKey(0)
    kx, kw_, kb = jax.random.split(key, 3)
    x = jax.random.normal(kx, (N, C, H, W), dtype=jnp.float32)
    conv_w = jax.random.normal(kw_, (C, C, 3, 3), dtype=jnp.float32) * 0.1
    conv_b = jax.random.normal(kb, (C,), dtype=jnp.float32) * 0.1

    out_conv = upsample_block_forward(x, conv_w, conv_b, with_conv=True)
    out_plain = upsample_block_forward(x, with_conv=False)
    jax.block_until_ready((out_conv, out_plain))

    ref_conv = _ref_forward(x, conv_w, conv_b, True)
    ref_plain = _ref_forward(x, None, None, False)

    assert out_conv.shape == (N, C, 2 * H, 2 * W)
    assert out_plain.shape == (N, C, 2 * H, 2 * W)
    # Only x is bf16-quantised (stage-1 MXU inputs); stage-2 weights/accum are f32.
    assert np.allclose(np.asarray(out_conv), np.asarray(ref_conv), atol=2e-2, rtol=2e-2)
    assert np.allclose(np.asarray(out_plain), np.asarray(ref_plain), atol=2e-2, rtol=2e-2)
    print("KERNEL_OK")
</pallas_src>

<mosaic_0001>
module attributes {stable_mosaic.version = 11 : i64} {
  func.func @_upsample_conv_kernel(%arg0: i32, %arg1: memref<2x64x16xf32, #tpu.memory_space<vmem>>, %arg2: memref<3x16x32xbf16, #tpu.memory_space<vmem>>, %arg3: memref<128x192xf32, #tpu.memory_space<vmem>>, %arg4: memref<128x1xf32, #tpu.memory_space<vmem>>, %arg5: memref<2x128x32xf32, #tpu.memory_space<vmem>>) attributes {dimension_semantics = [#tpu.dimension_semantics<parallel>], iteration_bounds = array<i64: 1>, scalar_prefetch = 0 : i64, scratch_operands = 0 : i64, tpu.core_type = #tpu.core_type<tc>, window_params = [{transform_indices = @transform_0, window_bounds = array<i64: 2, 64, 16>}, {pipeline_mode = #tpu.pipeline_mode<synchronous>, transform_indices = @transform_1, window_bounds = array<i64: 3, 16, 32>}, {pipeline_mode = #tpu.pipeline_mode<synchronous>, transform_indices = @transform_2, window_bounds = array<i64: 128, 192>}, {pipeline_mode = #tpu.pipeline_mode<synchronous>, transform_indices = @transform_3, window_bounds = array<i64: 128, 1>}, {transform_indices = @transform_4, window_bounds = array<i64: 2, 128, 32>}]} {
    %c0 = arith.constant 0 : index
    %c0_0 = arith.constant 0 : index
    %0 = vector.load %arg3[%c0, %c0_0] : memref<128x192xf32, #tpu.memory_space<vmem>>, vector<128x192xf32>
    %c0_1 = arith.constant 0 : index
    %c0_2 = arith.constant 0 : index
    %1 = vector.load %arg4[%c0_1, %c0_2] : memref<128x1xf32, #tpu.memory_space<vmem>>, vector<128x1xf32>
    %c0_3 = arith.constant 0 : index
    %c0_4 = arith.constant 0 : index
    %c0_5 = arith.constant 0 : index
    %2 = vector.load %arg1[%c0_3, %c0_4, %c0_5] : memref<2x64x16xf32, #tpu.memory_space<vmem>>, vector<1x64x16xf32>
    %3 = vector.shape_cast %2 : vector<1x64x16xf32> to vector<64x16xf32>
    %4 = arith.truncf %3 : vector<64x16xf32> to vector<64x16xbf16>
    %c0_6 = arith.constant 0 : index
    %c0_7 = arith.constant 0 : index
    %c0_8 = arith.constant 0 : index
    %5 = vector.load %arg2[%c0_6, %c0_7, %c0_8] : memref<3x16x32xbf16, #tpu.memory_space<vmem>>, vector<1x16x32xbf16>
    %6 = vector.shape_cast %5 : vector<1x16x32xbf16> to vector<16x32xbf16>
    %cst = arith.constant dense<0.000000e+00> : vector<64x32xf32>
    %7 = tpu.matmul %4, %6, %cst {dimension_numbers = #tpu.dot_dimension_numbers<[1], [0], [0], [1], [0, 0, 1, 1], [], []>} : vector<64x16xbf16>, vector<16x32xbf16>, vector<64x32xf32> -> vector<64x32xf32>
    %c1 = arith.constant 1 : index
    %c0_9 = arith.constant 0 : index
    %c0_10 = arith.constant 0 : index
    %8 = vector.load %arg2[%c1, %c0_9, %c0_10] : memref<3x16x32xbf16, #tpu.memory_space<vmem>>, vector<1x16x32xbf16>
    %9 = vector.shape_cast %8 : vector<1x16x32xbf16> to vector<16x32xbf16>
    %cst_11 = arith.constant dense<0.000000e+00> : vector<64x32xf32>
    %10 = tpu.matmul %4, %9, %cst_11 {dimension_numbers = #tpu.dot_dimension_numbers<[1], [0], [0], [1], [0, 0, 1, 1], [], []>} : vector<64x16xbf16>, vector<16x32xbf16>, vector<64x32xf32> -> vector<64x32xf32>
    %c2 = arith.constant 2 : index
    %c0_12 = arith.constant 0 : index
    %c0_13 = arith.constant 0 : index
    %11 = vector.load %arg2[%c2, %c0_12, %c0_13] : memref<3x16x32xbf16, #tpu.memory_space<vmem>>, vector<1x16x32xbf16>
    %12 = vector.shape_cast %11 : vector<1x16x32xbf16> to vector<16x32xbf16>
    %cst_14 = arith.constant dense<0.000000e+00> : vector<64x32xf32>
    %13 = tpu.matmul %4, %12, %cst_14 {dimension_numbers = #tpu.dot_dimension_numbers<[1], [0], [0], [1], [0, 0, 1, 1], [], []>} : vector<64x16xbf16>, vector<16x32xbf16>, vector<64x32xf32> -> vector<64x32xf32>
    %14 = tpu.concatenate %7, %10, %13 in 0 : vector<64x32xf32>, vector<64x32xf32>, vector<64x32xf32> -> vector<192x32xf32>
    %cst_15 = arith.constant dense<0.000000e+00> : vector<128x32xf32>
    %15 = tpu.matmul %0, %14, %cst_15 {dimension_numbers = #tpu.dot_dimension_numbers<[1], [0], [0], [1], [0, 0, 1, 1], [], []>} : vector<128x192xf32>, vector<192x32xf32>, vector<128x32xf32> -> vector<128x32xf32>
    %16 = vector.broadcast %1 : vector<128x1xf32> to vector<128x32xf32>
    %17 = arith.addf %15, %16 : vector<128x32xf32>
    %c0_16 = arith.constant 0 : index
    %c0_17 = arith.constant 0 : index
    %c0_18 = arith.constant 0 : index
    %18 = vector.load %arg5[%c0_16, %c0_17, %c0_18] : memref<2x128x32xf32, #tpu.memory_space<vmem>>, vector<1x128x32xf32>
    %19 = vector.shape_cast %18 : vector<1x128x32xf32> to vector<128x32xf32>
    %20 = vector.shape_cast %17 : vector<128x32xf32> to vector<1x128x32xf32>
    tpu.vector_store %arg5[%c0_16, %c0_17, %c0_18], %20 {strides = array<i32>} : memref<2x128x32xf32, #tpu.memory_space<vmem>>, vector<1x128x32xf32>,
    %c1_19 = arith.constant 1 : index
    %c0_20 = arith.constant 0 : index
    %c0_21 = arith.constant 0 : index
    %21 = vector.load %arg1[%c1_19, %c0_20, %c0_21] : memref<2x64x16xf32, #tpu.memory_space<vmem>>, vector<1x64x16xf32>
    %22 = vector.shape_cast %21 : vector<1x64x16xf32> to vector<64x16xf32>
    %23 = arith.truncf %22 : vector<64x16xf32> to vector<64x16xbf16>
    %c0_22 = arith.constant 0 : index
    %c0_23 = arith.constant 0 : index
    %c0_24 = arith.constant 0 : index
    %24 = vector.load %arg2[%c0_22, %c0_23, %c0_24] : memref<3x16x32xbf16, #tpu.memory_space<vmem>>, vector<1x16x32xbf16>
    %25 = vector.shape_cast %24 : vector<1x16x32xbf16> to vector<16x32xbf16>
    %cst_25 = arith.constant dense<0.000000e+00> : vector<64x32xf32>
    %26 = tpu.matmul %23, %25, %cst_25 {dimension_numbers = #tpu.dot_dimension_numbers<[1], [0], [0], [1], [0, 0, 1, 1], [], []>} : vector<64x16xbf16>, vector<16x32xbf16>, vector<64x32xf32> -> vector<64x32xf32>
    %c1_26 = arith.constant 1 : index
    %c0_27 = arith.constant 0 : index
    %c0_28 = arith.constant 0 : index
    %27 = vector.load %arg2[%c1_26, %c0_27, %c0_28] : memref<3x16x32xbf16, #tpu.memory_space<vmem>>, vector<1x16x32xbf16>
    %28 = vector.shape_cast %27 : vector<1x16x32xbf16> to vector<16x32xbf16>
    %cst_29 = arith.constant dense<0.000000e+00> : vector<64x32xf32>
    %29 = tpu.matmul %23, %28, %cst_29 {dimension_numbers = #tpu.dot_dimension_numbers<[1], [0], [0], [1], [0, 0, 1, 1], [], []>} : vector<64x16xbf16>, vector<16x32xbf16>, vector<64x32xf32> -> vector<64x32xf32>
    %c2_30 = arith.constant 2 : index
    %c0_31 = arith.constant 0 : index
    %c0_32 = arith.constant 0 : index
    %30 = vector.load %arg2[%c2_30, %c0_31, %c0_32] : memref<3x16x32xbf16, #tpu.memory_space<vmem>>, vector<1x16x32xbf16>
    %31 = vector.shape_cast %30 : vector<1x16x32xbf16> to vector<16x32xbf16>
    %cst_33 = arith.constant dense<0.000000e+00> : vector<64x32xf32>
    %32 = tpu.matmul %23, %31, %cst_33 {dimension_numbers = #tpu.dot_dimension_numbers<[1], [0], [0], [1], [0, 0, 1, 1], [], []>} : vector<64x16xbf16>, vector<16x32xbf16>, vector<64x32xf32> -> vector<64x32xf32>
    %33 = tpu.concatenate %26, %29, %32 in 0 : vector<64x32xf32>, vector<64x32xf32>, vector<64x32xf32> -> vector<192x32xf32>
    %cst_34 = arith.constant dense<0.000000e+00> : vector<128x32xf32>
    %34 = tpu.matmul %0, %33, %cst_34 {dimension_numbers = #tpu.dot_dimension_numbers<[1], [0], [0], [1], [0, 0, 1, 1], [], []>} : vector<128x192xf32>, vector<192x32xf32>, vector<128x32xf32> -> vector<128x32xf32>
    %35 = vector.broadcast %1 : vector<128x1xf32> to vector<128x32xf32>
    %36 = arith.addf %34, %35 : vector<128x32xf32>
    %c1_35 = arith.constant 1 : index
    %c0_36 = arith.constant 0 : index
    %c0_37 = arith.constant 0 : index
    %37 = vector.load %arg5[%c1_35, %c0_36, %c0_37] : memref<2x128x32xf32, #tpu.memory_space<vmem>>, vector<1x128x32xf32>
    %38 = vector.shape_cast %37 : vector<1x128x32xf32> to vector<128x32xf32>
    %39 = vector.shape_cast %36 : vector<128x32xf32> to vector<1x128x32xf32>
    tpu.vector_store %arg5[%c1_35, %c0_36, %c0_37], %39 {strides = array<i32>} : memref<2x128x32xf32, #tpu.memory_space<vmem>>, vector<1x128x32xf32>,
    return
  }
  func.func @transform_0(%arg0: i32) -> (i32, i32, i32) {
    %c0_i32 = arith.constant 0 : i32
    %c0_i32_0 = arith.constant 0 : i32
    %c0_i32_1 = arith.constant 0 : i32
    return %arg0, %c0_i32, %c0_i32_0 : i32, i32, i32
  }
  func.func @transform_1(%arg0: i32) -> (i32, i32, i32) {
    %c0_i32 = arith.constant 0 : i32
    %c0_i32_0 = arith.constant 0 : i32
    %c0_i32_1 = arith.constant 0 : i32
    %c0_i32_2 = arith.constant 0 : i32
    return %c0_i32, %c0_i32_0, %c0_i32_1 : i32, i32, i32
  }
  func.func @transform_2(%arg0: i32) -> (i32, i32) {
    %c0_i32 = arith.constant 0 : i32
    %c0_i32_0 = arith.constant 0 : i32
    %c0_i32_1 = arith.constant 0 : i32
    return %c0_i32, %c0_i32_0 : i32, i32
  }
  func.func @transform_3(%arg0: i32) -> (i32, i32) {
    %c0_i32 = arith.constant 0 : i32
    %c0_i32_0 = arith.constant 0 : i32
    %c0_i32_1 = arith.constant 0 : i32
    return %c0_i32, %c0_i32_0 : i32, i32
  }
  func.func @transform_4(%arg0: i32) -> (i32, i32, i32) {
    %c0_i32 = arith.constant 0 : i32
    %c0_i32_0 = arith.constant 0 : i32
    %c0_i32_1 = arith.constant 0 : i32
    return %arg0, %c0_i32, %c0_i32_0 : i32, i32, i32
  }
}

</mosaic_0001>

<llo_original>
// kernel: tpu_custom_call.1
$region0: #{tpu_custom_call.1}
  #allocation0 [shape = 'u32[]', space=smem, size = 0x4, offset = 0x4, fixed_abs, tag = 'smem constant byte address 0x4 - core index']
  #allocation1 [shape = 'u32[144,128]{1,0:T(1,128)}', space=vmem, size = 0x12000, scoped, tag = 'internal scratch']
  %s0 = inlined_call_operand.vmem [shape: f32[2,64,16], index: 0, kind: input, shape index: {}]
  %s1 = inlined_call_operand.vmem [shape: bf16[3,16,32], index: 1, kind: input, shape index: {}]
  %s2 = inlined_call_operand.vmem [shape: f32[128,192], index: 2, kind: input, shape index: {}]
  %s3 = inlined_call_operand.vmem [shape: f32[128,1], index: 3, kind: input, shape index: {}]
  %s4 = inlined_call_operand.vmem [shape: f32[2,128,32], index: 4, kind: output, shape index: {}]
  %s5 = sld [smem:[#allocation0]]
  $region26: #{tpu_custom_call.1} parent=0
    _
  %s7 = ssub.s32 1, %s5
  %s8 = scalar_select 0, %s7, %s5
  // Predicated region
  $region2: #{tpu_custom_call.1} parent=0 // pred_check
    _
  $region3: #{tpu_custom_call.1} parent=0 // pred_check_branch
    %10 = sbr.rel (0) target = $region5
  $region4: #{tpu_custom_call.1} parent=0 // pred_region
    _
  $region5: #{tpu_custom_call.1} parent=0 // pred_fallthru
    _
  // Predicated region
  $region6: #{tpu_custom_call.1} parent=0 // pred_check
    _
  $region7: #{tpu_custom_call.1} parent=0 // pred_check_branch
    %12 = sbr.rel (0) target = $region9
  $region8: #{tpu_custom_call.1} parent=0 // pred_region
    _
  $region9: #{tpu_custom_call.1} parent=0 // pred_fallthru
    _
  // Predicated region
  $region10: #{tpu_custom_call.1} parent=0 // pred_check
    _
  $region11: #{tpu_custom_call.1} parent=0 // pred_check_branch
    %14 = sbr.rel (0) target = $region13
  $region12: #{tpu_custom_call.1} parent=0 // pred_region
    _
  $region13: #{tpu_custom_call.1} parent=0 // pred_fallthru
    _
  // Predicated region
  $region14: #{tpu_custom_call.1} parent=0 // pred_check
    _
  $region15: #{tpu_custom_call.1} parent=0 // pred_check_branch
    %16 = sbr.rel (0) target = $region17
  $region16: #{tpu_custom_call.1} parent=0 // pred_region
    _
  $region17: #{tpu_custom_call.1} parent=0 // pred_fallthru
    _
  %v18 = vld [vmem:[%s2] sm:$0xff]
  %v19 = vld [vmem:[%s2 + $0x8] sm:$0xff]
  %v20 = vld [vmem:[%s2 + $0x10] sm:$0xff]
  %v21 = vld [vmem:[%s2 + $0x18] sm:$0xff]
  %v22 = vld [vmem:[%s2 + $0x20] sm:$0xff]
  %v23 = vld [vmem:[%s2 + $0x28] sm:$0xff]
  %v24 = vld [vmem:[%s2 + $0x30] sm:$0xff]
  %v25 = vld [vmem:[%s2 + $0x38] sm:$0xff]
  %v26 = vld [vmem:[%s2 + $0x40] sm:$0xff]
  %v27 = vld [vmem:[%s2 + $0x48] sm:$0xff]
  %v28 = vld [vmem:[%s2 + $0x50] sm:$0xff]
  %v29 = vld [vmem:[%s2 + $0x58] sm:$0xff]
  %v30 = vld [vmem:[%s2 + $0x60] sm:$0xff]
  %v31 = vld [vmem:[%s2 + $0x68] sm:$0xff]
  %v32 = vld [vmem:[%s2 + $0x70] sm:$0xff]
  %v33 = vld [vmem:[%s2 + $0x78] sm:$0xff]
  %v34 = vld [vmem:[%s2 + $0x80] sm:$0xff]
  %v35 = vld [vmem:[%s2 + $0x88] sm:$0xff]
  %v36 = vld [vmem:[%s2 + $0x90] sm:$0xff]
  %v37 = vld [vmem:[%s2 + $0x98] sm:$0xff]
  %v38 = vld [vmem:[%s2 + $0xa0] sm:$0xff]
  %v39 = vld [vmem:[%s2 + $0xa8] sm:$0xff]
  %v40 = vld [vmem:[%s2 + $0xb0] sm:$0xff]
  %v41 = vld [vmem:[%s2 + $0xb8] sm:$0xff]
  %v42 = vld [vmem:[%s2 + $0xc0] sm:$0xff]
  %v43 = vld [vmem:[%s2 + $0xc8] sm:$0xff]
  %v44 = vld [vmem:[%s2 + $0xd0] sm:$0xff]
  %v45 = vld [vmem:[%s2 + $0xd8] sm:$0xff]
  %v46 = vld [vmem:[%s2 + $0xe0] sm:$0xff]
  %v47 = vld [vmem:[%s2 + $0xe8] sm:$0xff]
  %v48 = vld [vmem:[%s2 + $0xf0] sm:$0xff]
  %v49 = vld [vmem:[%s2 + $0xf8] sm:$0xff]
  %v50 = vld [vmem:[%s3] sm:$0xff]
  %v51 = vld [vmem:[%s3 + $0x8] sm:$0xff]
  %v52 = vld [vmem:[%s3 + $0x10] sm:$0xff]
  %v53 = vld [vmem:[%s3 + $0x18] sm:$0xff]
  %v54 = vld [vmem:[%s3 + $0x20] sm:$0xff]
  %v55 = vld [vmem:[%s3 + $0x28] sm:$0xff]
  %v56 = vld [vmem:[%s3 + $0x30] sm:$0xff]
  %v57 = vld [vmem:[%s3 + $0x38] sm:$0xff]
  %v58 = vld [vmem:[%s3 + $0x40] sm:$0xff]
  %v59 = vld [vmem:[%s3 + $0x48] sm:$0xff]
  %v60 = vld [vmem:[%s3 + $0x50] sm:$0xff]
  %v61 = vld [vmem:[%s3 + $0x58] sm:$0xff]
  %v62 = vld [vmem:[%s3 + $0x60] sm:$0xff]
  %v63 = vld [vmem:[%s3 + $0x68] sm:$0xff]
  %v64 = vld [vmem:[%s3 + $0x70] sm:$0xff]
  %v65 = vld [vmem:[%s3 + $0x78] sm:$0xff]
  %v66 = vld [vmem:[%s0] sm:$0xff]
  %v67 = vld [vmem:[%s0 + $0x8] sm:$0xff]
  %v68 = vld [vmem:[%s0 + $0x10] sm:$0xff]
  %v69 = vld [vmem:[%s0 + $0x18] sm:$0xff]
  %v70 = vld [vmem:[%s0 + $0x20] sm:$0xff]
  %v71 = vld [vmem:[%s0 + $0x28] sm:$0xff]
  %v72 = vld [vmem:[%s0 + $0x30] sm:$0xff]
  %v73 = vld [vmem:[%s0 + $0x38] sm:$0xff]
  %v74 = vpack.c.bf16 %v67, %v66
  %v75 = vpack.c.bf16 %v69, %v68
  %v76 = vpack.c.bf16 %v71, %v70
  %v77 = vpack.c.bf16 %v73, %v72
  %v78 = vld [vmem:[%s1] sm:$0xf]
  %v79 = vld [vmem:[%s1 + $0x4] sm:$0xf]
  %v82 = vunpack.c.l.b16 %v78
  %v83 = vunpack.c.l.b16 %v79
  %v84 = vpack.c.b16 %v83, %v82
  %vm86 = vcmask 130048
  %v88 = vsel %vm86, %v74, 0
  %v91 = vsel %vm86, %v75, 0
  %v94 = vsel %vm86, %v76, 0
  %v97 = vsel %vm86, %v77, 0
  %99 = vmatprep.subr.bf16.mxu0 0
  %100 = vmatpush1.bf16.msra.mxu0 0
  %101 = vmatprep.subr.bf16.mxu0 0
  %102 = vmatpush1.bf16.msra.mxu0 0
  %103 = vmatprep.subr.bf16.mxu0 0
  %104 = vmatpush1.bf16.msra.mxu0 0
  %105 = vmatprep.subr.bf16.mxu0 0
  %106 = vmatpush1.bf16.msra.mxu0 0
  %107 = vmatprep.subr.bf16.mxu0 0
  %108 = vmatpush1.bf16.msra.mxu0 0
  %109 = vmatprep.subr.bf16.mxu0 0
  %110 = vmatpush1.bf16.msra.mxu0 0
  %111 = vmatprep.subr.bf16.mxu0 0
  %112 = vmatpush1.bf16.msra.mxu0 0
  %113 = vmatprep.subr.bf16.mxu0 0
  %114 = vmatpush1.bf16.msra.mxu0 %v84
  %115 = vmatprep.subr.bf16.mxu0 0
  %116 = vmatpush2.bf16.msra.mxu0 0
  %117 = vmatprep.subr.bf16.mxu0 0
  %118 = vmatpush2.bf16.msra.mxu0 0
  %119 = vmatprep.subr.bf16.mxu0 0
  %120 = vmatpush2.bf16.msra.mxu0 0
  %121 = vmatprep.subr.bf16.mxu0 0
  %122 = vmatpush2.bf16.msra.mxu0 0
  %123 = vmatprep.subr.bf16.mxu0 0
  %124 = vmatpush2.bf16.msra.mxu0 0
  %125 = vmatprep.subr.bf16.mxu0 0
  %126 = vmatpush2.bf16.msra.mxu0 0
  %127 = vmatprep.subr.bf16.mxu0 0
  %128 = vmatpush2.bf16.msra.mxu0 0
  %129 = vmatprep.subr.bf16.mxu0 0
  %130 = vmatpush2.bf16.msra.mxu0 0
  %131 = vmatprep.mubr.bf16.mxu0 0
  %132 = vmatmul.mubr.bf16.gmra.mxu0 %v88
  %v133 = vpop.f32.mrf.mxu0
  %v134 = vadd.f32 0.0, %v133
  %v135 = vpop.f32.mrf.mxu0
  %v136 = vpop.f32.mrf.mxu0
  %v137 = vadd.f32 0.0, %v136
  %v138 = vpop.f32.mrf.mxu0
  %139 = vmatprep.mubr.bf16.mxu0 0
  %140 = vmatmul.mubr.bf16.gmra.mxu0 %v91
  %v141 = vpop.f32.mrf.mxu0
  %v142 = vadd.f32 0.0, %v141
  %v143 = vpop.f32.mrf.mxu0
  %v144 = vpop.f32.mrf.mxu0
  %v145 = vadd.f32 0.0, %v144
  %v146 = vpop.f32.mrf.mxu0
  %147 = vmatprep.mubr.bf16.mxu0 0
  %148 = vmatmul.mubr.bf16.gmra.mxu0 %v94
  %v149 = vpop.f32.mrf.mxu0
  %v150 = vadd.f32 0.0, %v149
  %v151 = vpop.f32.mrf.mxu0
  %v152 = vpop.f32.mrf.mxu0
  %v153 = vadd.f32 0.0, %v152
  %v154 = vpop.f32.mrf.mxu0
  %155 = vmatprep.mubr.bf16.mxu0 0
  %156 = vmatmul.mubr.bf16.gmra.mxu0 %v97
  %v157 = vpop.f32.mrf.mxu0
  %v158 = vadd.f32 0.0, %v157
  %v159 = vpop.f32.mrf.mxu0
  %v160 = vpop.f32.mrf.mxu0
  %v161 = vadd.f32 0.0, %v160
  %v162 = vpop.f32.mrf.mxu0
  %163 = vdwg.mxu0
  %s164 = scalar_lea.vmem %s1, 8
  %v165 = vld [vmem:[%s164] sm:$0xf]
  %v166 = vld [vmem:[%s164 + $0x4] sm:$0xf]
  %v169 = vunpack.c.l.b16 %v165
  %v170 = vunpack.c.l.b16 %v166
  %v171 = vpack.c.b16 %v170, %v169
  %173 = vmatprep.subr.bf16.mxu0 0
  %174 = vmatpush1.bf16.msra.mxu0 0
  %175 = vmatprep.subr.bf16.mxu0 0
  %176 = vmatpush1.bf16.msra.mxu0 0
  %177 = vmatprep.subr.bf16.mxu0 0
  %178 = vmatpush1.bf16.msra.mxu0 0
  %179 = vmatprep.subr.bf16.mxu0 0
  %180 = vmatpush1.bf16.msra.mxu0 0
  %181 = vmatprep.subr.bf16.mxu0 0
  %182 = vmatpush1.bf16.msra.mxu0 0
  %183 = vmatprep.subr.bf16.mxu0 0
  %184 = vmatpush1.bf16.msra.mxu0 0
  %185 = vmatprep.subr.bf16.mxu0 0
  %186 = vmatpush1.bf16.msra.mxu0 0
  %187 = vmatprep.subr.bf16.mxu0 0
  %188 = vmatpush1.bf16.msra.mxu0 %v171
  %189 = vmatprep.subr.bf16.mxu0 0
  %190 = vmatpush2.bf16.msra.mxu0 0
  %191 = vmatprep.subr.bf16.mxu0 0
  %192 = vmatpush2.bf16.msra.mxu0 0
  %193 = vmatprep.subr.bf16.mxu0 0
  %194 = vmatpush2.bf16.msra.mxu0 0
  %195 = vmatprep.subr.bf16.mxu0 0
  %196 = vmatpush2.bf16.msra.mxu0 0
  %197 = vmatprep.subr.bf16.mxu0 0
  %198 = vmatpush2.bf16.msra.mxu0 0
  %199 = vmatprep.subr.bf16.mxu0 0
  %200 = vmatpush2.bf16.msra.mxu0 0
  %201 = vmatprep.subr.bf16.mxu0 0
  %202 = vmatpush2.bf16.msra.mxu0 0
  %203 = vmatprep.subr.bf16.mxu0 0
  %204 = vmatpush2.bf16.msra.mxu0 0
  %205 = vmatprep.mubr.bf16.mxu0 0
  %206 = vmatmul.mubr.bf16.gmra.mxu0 %v88
  %v207 = vpop.f32.mrf.mxu0
  %v208 = vadd.f32 0.0, %v207
  %v209 = vpop.f32.mrf.mxu0
  %v210 = vpop.f32.mrf.mxu0
  %v211 = vadd.f32 0.0, %v210
  %v212 = vpop.f32.mrf.mxu0
  %213 = vmatprep.mubr.bf16.mxu0 0
  %214 = vmatmul.mubr.bf16.gmra.mxu0 %v91
  %v215 = vpop.f32.mrf.mxu0
  %v216 = vadd.f32 0.0, %v215
  %v217 = vpop.f32.mrf.mxu0
  %v218 = vpop.f32.mrf.mxu0
  %v219 = vadd.f32 0.0, %v218
  %v220 = vpop.f32.mrf.mxu0
  %221 = vmatprep.mubr.bf16.mxu0 0
  %222 = vmatmul.mubr.bf16.gmra.mxu0 %v94
  %v223 = vpop.f32.mrf.mxu0
  %v224 = vadd.f32 0.0, %v223
  %v225 = vpop.f32.mrf.mxu0
  %v226 = vpop.f32.mrf.mxu0
  %v227 = vadd.f32 0.0, %v226
  %v228 = vpop.f32.mrf.mxu0
  %229 = vmatprep.mubr.bf16.mxu0 0
  %230 = vmatmul.mubr.bf16.gmra.mxu0 %v97
  %v231 = vpop.f32.mrf.mxu0
  %v232 = vadd.f32 0.0, %v231
  %v233 = vpop.f32.mrf.mxu0
  %v234 = vpop.f32.mrf.mxu0
  %v235 = vadd.f32 0.0, %v234
  %v236 = vpop.f32.mrf.mxu0
  %237 = vdwg.mxu0
  %s238 = scalar_lea.vmem %s1, 16
  %v239 = vld [vmem:[%s238] sm:$0xf]
  %v240 = vld [vmem:[%s238 + $0x4] sm:$0xf]
  %v243 = vunpack.c.l.b16 %v239
  %v244 = vunpack.c.l.b16 %v240
  %v245 = vpack.c.b16 %v244, %v243
  %247 = vmatprep.subr.bf16.mxu0 0
  %248 = vmatpush1.bf16.msra.mxu0 0
  %249 = vmatprep.subr.bf16.mxu0 0
  %250 = vmatpush1.bf16.msra.mxu0 0
  %251 = vmatprep.subr.bf16.mxu0 0
  %252 = vmatpush1.bf16.msra.mxu0 0
  %253 = vmatprep.subr.bf16.mxu0 0
  %254 = vmatpush1.bf16.msra.mxu0 0
  %255 = vmatprep.subr.bf16.mxu0 0
  %256 = vmatpush1.bf16.msra.mxu0 0
  %257 = vmatprep.subr.bf16.mxu0 0
  %258 = vmatpush1.bf16.msra.mxu0 0
  %259 = vmatprep.subr.bf16.mxu0 0
  %260 = vmatpush1.bf16.msra.mxu0 0
  %261 = vmatprep.subr.bf16.mxu0 0
  %262 = vmatpush1.bf16.msra.mxu0 %v245
  %263 = vmatprep.subr.bf16.mxu0 0
  %264 = vmatpush2.bf16.msra.mxu0 0
  %265 = vmatprep.subr.bf16.mxu0 0
  %266 = vmatpush2.bf16.msra.mxu0 0
  %267 = vmatprep.subr.bf16.mxu0 0
  %268 = vmatpush2.bf16.msra.mxu0 0
  %269 = vmatprep.subr.bf16.mxu0 0
  %270 = vmatpush2.bf16.msra.mxu0 0
  %271 = vmatprep.subr.bf16.mxu0 0
  %272 = vmatpush2.bf16.msra.mxu0 0
  %273 = vmatprep.subr.bf16.mxu0 0
  %274 = vmatpush2.bf16.msra.mxu0 0
  %275 = vmatprep.subr.bf16.mxu0 0
  %276 = vmatpush2.bf16.msra.mxu0 0
  %277 = vmatprep.subr.bf16.mxu0 0
  %278 = vmatpush2.bf16.msra.mxu0 0
  %279 = vmatprep.mubr.bf16.mxu0 0
  %280 = vmatmul.mubr.bf16.gmra.mxu0 %v88
  %v281 = vpop.f32.mrf.mxu0
  %v282 = vadd.f32 0.0, %v281
  %v283 = vpop.f32.mrf.mxu0
  %v284 = vpop.f32.mrf.mxu0
  %v285 = vadd.f32 0.0, %v284
  %v286 = vpop.f32.mrf.mxu0
  %287 = vmatprep.mubr.bf16.mxu0 0
  %288 = vmatmul.mubr.bf16.gmra.mxu0 %v91
  %v289 = vpop.f32.mrf.mxu0
  %v290 = vadd.f32 0.0, %v289
  %v291 = vpop.f32.mrf.mxu0
  %v292 = vpop.f32.mrf.mxu0
  %v293 = vadd.f32 0.0, %v292
  %v294 = vpop.f32.mrf.mxu0
  %295 = vmatprep.mubr.bf16.mxu0 0
  %296 = vmatmul.mubr.bf16.gmra.mxu0 %v94
  %v297 = vpop.f32.mrf.mxu0
  %v298 = vadd.f32 0.0, %v297
  %v299 = vpop.f32.mrf.mxu0
  %v300 = vpop.f32.mrf.mxu0
  %v301 = vadd.f32 0.0, %v300
  %v302 = vpop.f32.mrf.mxu0
  %303 = vmatprep.mubr.bf16.mxu0 0
  %304 = vmatmul.mubr.bf16.gmra.mxu0 %v97
  %v305 = vpop.f32.mrf.mxu0
  %v306 = vadd.f32 0.0, %v305
  %v307 = vpop.f32.mrf.mxu0
  %v308 = vpop.f32.mrf.mxu0
  %v309 = vadd.f32 0.0, %v308
  %v310 = vpop.f32.mrf.mxu0
  %311 = vdwg.mxu0
  %313 = vset.pattern.permute.xlu0 0
  %314 = vperm.xlu0 %313, %v50
  %v315 = vpop.permute.xlu0 %314
  %318 = vset.pattern.permute.xlu0 0
  %319 = vperm.xlu0 %318, %v51
  %v320 = vpop.permute.xlu0 %319
  %323 = vset.pattern.permute.xlu0 0
  %324 = vperm.xlu0 %323, %v52
  %v325 = vpop.permute.xlu0 %324
  %328 = vset.pattern.permute.xlu0 0
  %329 = vperm.xlu0 %328, %v53
  %v330 = vpop.permute.xlu0 %329
  %333 = vset.pattern.permute.xlu0 0
  %334 = vperm.xlu0 %333, %v54
  %v335 = vpop.permute.xlu0 %334
  %338 = vset.pattern.permute.xlu0 0
  %339 = vperm.xlu0 %338, %v55
  %v340 = vpop.permute.xlu0 %339
  %343 = vset.pattern.permute.xlu0 0
  %344 = vperm.xlu0 %343, %v56
  %v345 = vpop.permute.xlu0 %344
  %348 = vset.pattern.permute.xlu0 0
  %349 = vperm.xlu0 %348, %v57
  %v350 = vpop.permute.xlu0 %349
  %353 = vset.pattern.permute.xlu0 0
  %354 = vperm.xlu0 %353, %v58
  %v355 = vpop.permute.xlu0 %354
  %358 = vset.pattern.permute.xlu0 0
  %359 = vperm.xlu0 %358, %v59
  %v360 = vpop.permute.xlu0 %359
  %363 = vset.pattern.permute.xlu0 0
  %364 = vperm.xlu0 %363, %v60
  %v365 = vpop.permute.xlu0 %364
  %368 = vset.pattern.permute.xlu0 0
  %369 = vperm.xlu0 %368, %v61
  %v370 = vpop.permute.xlu0 %369
  %373 = vset.pattern.permute.xlu0 0
  %374 = vperm.xlu0 %373, %v62
  %v375 = vpop.permute.xlu0 %374
  %378 = vset.pattern.permute.xlu0 0
  %379 = vperm.xlu0 %378, %v63
  %v380 = vpop.permute.xlu0 %379
  %383 = vset.pattern.permute.xlu0 0
  %384 = vperm.xlu0 %383, %v64
  %v385 = vpop.permute.xlu0 %384
  %388 = vset.pattern.permute.xlu0 0
  %389 = vperm.xlu0 %388, %v65
  %v390 = vpop.permute.xlu0 %389
  %vm392 = vcmask 523264
  %v394 = vsel %vm392, %v19, 0
  %v397 = vsel %vm392, %v21, 0
  %v400 = vsel %vm392, %v23, 0
  %v403 = vsel %vm392, %v25, 0
  %v406 = vsel %vm392, %v27, 0
  %v409 = vsel %vm392, %v29, 0
  %v412 = vsel %vm392, %v31, 0
  %v415 = vsel %vm392, %v33, 0
  %v418 = vsel %vm392, %v35, 0
  %v421 = vsel %vm392, %v37, 0
  %v424 = vsel %vm392, %v39, 0
  %v427 = vsel %vm392, %v41, 0
  %v430 = vsel %vm392, %v43, 0
  %v433 = vsel %vm392, %v45, 0
  %v436 = vsel %vm392, %v47, 0
  %v439 = vsel %vm392, %v49, 0
  %441 = vmatprep.subr.mxu0 0.0
  %442 = vmatpush1.msra.mxu0 %v235
  %443 = vmatprep.subr.mxu0 0.0
  %444 = vmatpush1.msra.mxu0 %v232
  %445 = vmatprep.subr.mxu0 0.0
  %446 = vmatpush1.msra.mxu0 %v227
  %447 = vmatprep.subr.mxu0 0.0
  %448 = vmatpush1.msra.mxu0 %v224
  %449 = vmatprep.subr.mxu0 0.0
  %450 = vmatpush1.msra.mxu0 %v219
  %451 = vmatprep.subr.mxu0 0.0
  %452 = vmatpush1.msra.mxu0 %v216
  %453 = vmatprep.subr.mxu0 0.0
  %454 = vmatpush1.msra.mxu0 %v211
  %455 = vmatprep.subr.mxu0 0.0
  %456 = vmatpush1.msra.mxu0 %v208
  %457 = vmatprep.subr.mxu0 0.0
  %458 = vmatpush1.msra.mxu0 %v161
  %459 = vmatprep.subr.mxu0 0.0
  %460 = vmatpush1.msra.mxu0 %v158
  %461 = vmatprep.subr.mxu0 0.0
  %462 = vmatpush1.msra.mxu0 %v153
  %463 = vmatprep.subr.mxu0 0.0
  %464 = vmatpush1.msra.mxu0 %v150
  %465 = vmatprep.subr.mxu0 0.0
  %466 = vmatpush1.msra.mxu0 %v145
  %467 = vmatprep.subr.mxu0 0.0
  %468 = vmatpush1.msra.mxu0 %v142
  %469 = vmatprep.subr.mxu0 0.0
  %470 = vmatpush1.msra.mxu0 %v137
  %471 = vmatprep.subr.mxu0 0.0
  %472 = vmatpush1.msra.mxu0 %v134
  %473 = vmatprep.subr.mxu0 0.0
  %474 = vmatpush2.msra.mxu0 0.0
  %475 = vmatprep.subr.mxu0 0.0
  %476 = vmatpush2.msra.mxu0 0.0
  %477 = vmatprep.subr.mxu0 0.0
  %478 = vmatpush2.msra.mxu0 0.0
  %479 = vmatprep.subr.mxu0 0.0
  %480 = vmatpush2.msra.mxu0 0.0
  %481 = vmatprep.subr.mxu0 0.0
  %482 = vmatpush2.msra.mxu0 0.0
  %483 = vmatprep.subr.mxu0 0.0
  %484 = vmatpush2.msra.mxu0 0.0
  %485 = vmatprep.subr.mxu0 0.0
  %486 = vmatpush2.msra.mxu0 0.0
  %487 = vmatprep.subr.mxu0 0.0
  %488 = vmatpush2.msra.mxu0 0.0
  %489 = vmatprep.subr.mxu0 0.0
  %490 = vmatpush2.msra.mxu0 %v309
  %491 = vmatprep.subr.mxu0 0.0
  %492 = vmatpush2.msra.mxu0 %v306
  %493 = vmatprep.subr.mxu0 0.0
  %494 = vmatpush2.msra.mxu0 %v301
  %495 = vmatprep.subr.mxu0 0.0
  %496 = vmatpush2.msra.mxu0 %v298
  %497 = vmatprep.subr.mxu0 0.0
  %498 = vmatpush2.msra.mxu0 %v293
  %499 = vmatprep.subr.mxu0 0.0
  %500 = vmatpush2.msra.mxu0 %v290
  %501 = vmatprep.subr.mxu0 0.0
  %502 = vmatpush2.msra.mxu0 %v285
  %503 = vmatprep.subr.mxu0 0.0
  %504 = vmatpush2.msra.mxu0 %v282
  %505 = vmatprep.mubr.f32.mxu0 %v394
  %506 = vmatmul.mubr.f32.gmra.mxu0 %v18
  %v507 = vpop.f32.mrf.mxu0
  %v508 = vadd.f32 %v315, %v507
  %v509 = vpop.f32.mrf.mxu0
  %510 = vmatprep.mubr.f32.mxu0 %v397
  %511 = vmatmul.mubr.f32.gmra.mxu0 %v20
  %v512 = vpop.f32.mrf.mxu0
  %v513 = vadd.f32 %v320, %v512
  %v514 = vpop.f32.mrf.mxu0
  %515 = vmatprep.mubr.f32.mxu0 %v400
  %516 = vmatmul.mubr.f32.gmra.mxu0 %v22
  %v517 = vpop.f32.mrf.mxu0
  %v518 = vadd.f32 %v325, %v517
  %v519 = vpop.f32.mrf.mxu0
  %520 = vmatprep.mubr.f32.mxu0 %v403
  %521 = vmatmul.mubr.f32.gmra.mxu0 %v24
  %v522 = vpop.f32.mrf.mxu0
  %v523 = vadd.f32 %v330, %v522
  %v524 = vpop.f32.mrf.mxu0
  %525 = vmatprep.mubr.f32.mxu0 %v406
  %526 = vmatmul.mubr.f32.gmra.mxu0 %v26
  %v527 = vpop.f32.mrf.mxu0
  %v528 = vadd.f32 %v335, %v527
  %v529 = vpop.f32.mrf.mxu0
  %530 = vmatprep.mubr.f32.mxu0 %v409
  %531 = vmatmul.mubr.f32.gmra.mxu0 %v28
  %v532 = vpop.f32.mrf.mxu0
  %v533 = vadd.f32 %v340, %v532
  %v534 = vpop.f32.mrf.mxu0
  %535 = vmatprep.mubr.f32.mxu0 %v412
  %536 = vmatmul.mubr.f32.gmra.mxu0 %v30
  %v537 = vpop.f32.mrf.mxu0
  %v538 = vadd.f32 %v345, %v537
  %v539 = vpop.f32.mrf.mxu0
  %540 = vmatprep.mubr.f32.mxu0 %v415
  %541 = vmatmul.mubr.f32.gmra.mxu0 %v32
  %v542 = vpop.f32.mrf.mxu0
  %v543 = vadd.f32 %v350, %v542
  %v544 = vpop.f32.mrf.mxu0
  %545 = vmatprep.mubr.f32.mxu0 %v418
  %546 = vmatmul.mubr.f32.gmra.mxu0 %v34
  %v547 = vpop.f32.mrf.mxu0
  %v548 = vadd.f32 %v355, %v547
  %v549 = vpop.f32.mrf.mxu0
  %550 = vmatprep.mubr.f32.mxu0 %v421
  %551 = vmatmul.mubr.f32.gmra.mxu0 %v36
  %v552 = vpop.f32.mrf.mxu0
  %v553 = vadd.f32 %v360, %v552
  %v554 = vpop.f32.mrf.mxu0
  %555 = vmatprep.mubr.f32.mxu0 %v424
  %556 = vmatmul.mubr.f32.gmra.mxu0 %v38
  %v557 = vpop.f32.mrf.mxu0
  %v558 = vadd.f32 %v365, %v557
  %v559 = vpop.f32.mrf.mxu0
  %560 = vmatprep.mubr.f32.mxu0 %v427
  %561 = vmatmul.mubr.f32.gmra.mxu0 %v40
  %v562 = vpop.f32.mrf.mxu0
  %v563 = vadd.f32 %v370, %v562
  %v564 = vpop.f32.mrf.mxu0
  %565 = vmatprep.mubr.f32.mxu0 %v430
  %566 = vmatmul.mubr.f32.gmra.mxu0 %v42
  %v567 = vpop.f32.mrf.mxu0
  %v568 = vadd.f32 %v375, %v567
  %v569 = vpop.f32.mrf.mxu0
  %570 = vmatprep.mubr.f32.mxu0 %v433
  %571 = vmatmul.mubr.f32.gmra.mxu0 %v44
  %v572 = vpop.f32.mrf.mxu0
  %v573 = vadd.f32 %v380, %v572
  %v574 = vpop.f32.mrf.mxu0
  %575 = vmatprep.mubr.f32.mxu0 %v436
  %576 = vmatmul.mubr.f32.gmra.mxu0 %v46
  %v577 = vpop.f32.mrf.mxu0
  %v578 = vadd.f32 %v385, %v577
  %v579 = vpop.f32.mrf.mxu0
  %580 = vmatprep.mubr.f32.mxu0 %v439
  %581 = vmatmul.mubr.f32.gmra.mxu0 %v48
  %v582 = vpop.f32.mrf.mxu0
  %v583 = vadd.f32 %v390, %v582
  %v584 = vpop.f32.mrf.mxu0
  %585 = vdwg.mxu0
  %vm586 = vcmask 261120
  %587 = vst.msk [vmem:[%s4] sm:$0xff] %vm586, %v508
  %588 = vst.msk [vmem:[%s4 + $0x8] sm:$0xff] %vm586, %v513
  %589 = vst.msk [vmem:[%s4 + $0x10] sm:$0xff] %vm586, %v518
  %590 = vst.msk [vmem:[%s4 + $0x18] sm:$0xff] %vm586, %v523
  %591 = vst.msk [vmem:[%s4 + $0x20] sm:$0xff] %vm586, %v528
  %592 = vst.msk [vmem:[%s4 + $0x28] sm:$0xff] %vm586, %v533
  %593 = vst.msk [vmem:[%s4 + $0x30] sm:$0xff] %vm586, %v538
  %594 = vst.msk [vmem:[%s4 + $0x38] sm:$0xff] %vm586, %v543
  %595 = vst.msk [vmem:[%s4 + $0x40] sm:$0xff] %vm586, %v548
  %596 = vst.msk [vmem:[%s4 + $0x48] sm:$0xff] %vm586, %v553
  %597 = vst.msk [vmem:[%s4 + $0x50] sm:$0xff] %vm586, %v558
  %598 = vst.msk [vmem:[%s4 + $0x58] sm:$0xff] %vm586, %v563
  %599 = vst.msk [vmem:[%s4 + $0x60] sm:$0xff] %vm586, %v568
  %600 = vst.msk [vmem:[%s4 + $0x68] sm:$0xff] %vm586, %v573
  %601 = vst.msk [vmem:[%s4 + $0x70] sm:$0xff] %vm586, %v578
  %602 = vst.msk [vmem:[%s4 + $0x78] sm:$0xff] %vm586, %v583
  %s603 = scalar_lea.vmem %s0, 64
  %v604 = vld [vmem:[%s603] sm:$0xff]
  %v605 = vld [vmem:[%s603 + $0x8] sm:$0xff]
  %v606 = vld [vmem:[%s603 + $0x10] sm:$0xff]
  %v607 = vld [vmem:[%s603 + $0x18] sm:$0xff]
  %v608 = vld [vmem:[%s603 + $0x20] sm:$0xff]
  %v609 = vld [vmem:[%s603 + $0x28] sm:$0xff]
  %v610 = vld [vmem:[%s603 + $0x30] sm:$0xff]
  %v611 = vld [vmem:[%s603 + $0x38] sm:$0xff]
  %v612 = vpack.c.bf16 %v605, %v604
  %v613 = vpack.c.bf16 %v607, %v606
  %v614 = vpack.c.bf16 %v609, %v608
  %v615 = vpack.c.bf16 %v611, %v610
  %v616 = vld [vmem:[%s1] sm:$0xf]
  %v617 = vld [vmem:[%s1 + $0x4] sm:$0xf]
  %v620 = vunpack.c.l.b16 %v616
  %v621 = vunpack.c.l.b16 %v617
  %v622 = vpack.c.b16 %v621, %v620
  %v625 = vsel %vm86, %v612, 0
  %v628 = vsel %vm86, %v613, 0
  %v631 = vsel %vm86, %v614, 0
  %v634 = vsel %vm86, %v615, 0
  %636 = vmatprep.subr.bf16.mxu0 0
  %637 = vmatpush1.bf16.msra.mxu0 0
  %638 = vmatprep.subr.bf16.mxu0 0
  %639 = vmatpush1.bf16.msra.mxu0 0
  %640 = vmatprep.subr.bf16.mxu0 0
  %641 = vmatpush1.bf16.msra.mxu0 0
  %642 = vmatprep.subr.bf16.mxu0 0
  %643 = vmatpush1.bf16.msra.mxu0 0
  %644 = vmatprep.subr.bf16.mxu0 0
  %645 = vmatpush1.bf16.msra.mxu0 0
  %646 = vmatprep.subr.bf16.mxu0 0
  %647 = vmatpush1.bf16.msra.mxu0 0
  %648 = vmatprep.subr.bf16.mxu0 0
  %649 = vmatpush1.bf16.msra.mxu0 0
  %650 = vmatprep.subr.bf16.mxu0 0
  %651 = vmatpush1.bf16.msra.mxu0 %v622
  %652 = vmatprep.subr.bf16.mxu0 0
  %653 = vmatpush2.bf16.msra.mxu0 0
  %654 = vmatprep.subr.bf16.mxu0 0
  %655 = vmatpush2.bf16.msra.mxu0 0
  %656 = vmatprep.subr.bf16.mxu0 0
  %657 = vmatpush2.bf16.msra.mxu0 0
  %658 = vmatprep.subr.bf16.mxu0 0
  %659 = vmatpush2.bf16.msra.mxu0 0
  %660 = vmatprep.subr.bf16.mxu0 0
  %661 = vmatpush2.bf16.msra.mxu0 0
  %662 = vmatprep.subr.bf16.mxu0 0
  %663 = vmatpush2.bf16.msra.mxu0 0
  %664 = vmatprep.subr.bf16.mxu0 0
  %665 = vmatpush2.bf16.msra.mxu0 0
  %666 = vmatprep.subr.bf16.mxu0 0
  %667 = vmatpush2.bf16.msra.mxu0 0
  %668 = vmatprep.mubr.bf16.mxu0 0
  %669 = vmatmul.mubr.bf16.gmra.mxu0 %v625
  %v670 = vpop.f32.mrf.mxu0
  %v671 = vadd.f32 0.0, %v670
  %v672 = vpop.f32.mrf.mxu0
  %v673 = vpop.f32.mrf.mxu0
  %v674 = vadd.f32 0.0, %v673
  %v675 = vpop.f32.mrf.mxu0
  %676 = vmatprep.mubr.bf16.mxu0 0
  %677 = vmatmul.mubr.bf16.gmra.mxu0 %v628
  %v678 = vpop.f32.mrf.mxu0
  %v679 = vadd.f32 0.0, %v678
  %v680 = vpop.f32.mrf.mxu0
  %v681 = vpop.f32.mrf.mxu0
  %v682 = vadd.f32 0.0, %v681
  %v683 = vpop.f32.mrf.mxu0
  %684 = vmatprep.mubr.bf16.mxu0 0
  %685 = vmatmul.mubr.bf16.gmra.mxu0 %v631
  %v686 = vpop.f32.mrf.mxu0
  %v687 = vadd.f32 0.0, %v686
  %v688 = vpop.f32.mrf.mxu0
  %v689 = vpop.f32.mrf.mxu0
  %v690 = vadd.f32 0.0, %v689
  %v691 = vpop.f32.mrf.mxu0
  %692 = vmatprep.mubr.bf16.mxu0 0
  %693 = vmatmul.mubr.bf16.gmra.mxu0 %v634
  %v694 = vpop.f32.mrf.mxu0
  %v695 = vadd.f32 0.0, %v694
  %v696 = vpop.f32.mrf.mxu0
  %v697 = vpop.f32.mrf.mxu0
  %v698 = vadd.f32 0.0, %v697
  %v699 = vpop.f32.mrf.mxu0
  %700 = vdwg.mxu0
  %v701 = vld [vmem:[%s164] sm:$0xf]
  %v702 = vld [vmem:[%s164 + $0x4] sm:$0xf]
  %v705 = vunpack.c.l.b16 %v701
  %v706 = vunpack.c.l.b16 %v702
  %v707 = vpack.c.b16 %v706, %v705
  %709 = vmatprep.subr.bf16.mxu0 0
  %710 = vmatpush1.bf16.msra.mxu0 0
  %711 = vmatprep.subr.bf16.mxu0 0
  %712 = vmatpush1.bf16.msra.mxu0 0
  %713 = vmatprep.subr.bf16.mxu0 0
  %714 = vmatpush1.bf16.msra.mxu0 0
  %715 = vmatprep.subr.bf16.mxu0 0
  %716 = vmatpush1.bf16.msra.mxu0 0
  %717 = vmatprep.subr.bf16.mxu0 0
  %718 = vmatpush1.bf16.msra.mxu0 0
  %719 = vmatprep.subr.bf16.mxu0 0
  %720 = vmatpush1.bf16.msra.mxu0 0
  %721 = vmatprep.subr.bf16.mxu0 0
  %722 = vmatpush1.bf16.msra.mxu0 0
  %723 = vmatprep.subr.bf16.mxu0 0
  %724 = vmatpush1.bf16.msra.mxu0 %v707
  %725 = vmatprep.subr.bf16.mxu0 0
  %726 = vmatpush2.bf16.msra.mxu0 0
  %727 = vmatprep.subr.bf16.mxu0 0
  %728 = vmatpush2.bf16.msra.mxu0 0
  %729 = vmatprep.subr.bf16.mxu0 0
  %730 = vmatpush2.bf16.msra.mxu0 0
  %731 = vmatprep.subr.bf16.mxu0 0
  %732 = vmatpush2.bf16.msra.mxu0 0
  %733 = vmatprep.subr.bf16.mxu0 0
  %734 = vmatpush2.bf16.msra.mxu0 0
  %735 = vmatprep.subr.bf16.mxu0 0
  %736 = vmatpush2.bf16.msra.mxu0 0
  %737 = vmatprep.subr.bf16.mxu0 0
  %738 = vmatpush2.bf16.msra.mxu0 0
  %739 = vmatprep.subr.bf16.mxu0 0
  %740 = vmatpush2.bf16.msra.mxu0 0
  %741 = vmatprep.mubr.bf16.mxu0 0
  %742 = vmatmul.mubr.bf16.gmra.mxu0 %v625
  %v743 = vpop.f32.mrf.mxu0
  %v744 = vadd.f32 0.0, %v743
  %v745 = vpop.f32.mrf.mxu0
  %v746 = vpop.f32.mrf.mxu0
  %v747 = vadd.f32 0.0, %v746
  %v748 = vpop.f32.mrf.mxu0
  %749 = vmatprep.mubr.bf16.mxu0 0
  %750 = vmatmul.mubr.bf16.gmra.mxu0 %v628
  %v751 = vpop.f32.mrf.mxu0
  %v752 = vadd.f32 0.0, %v751
  %v753 = vpop.f32.mrf.mxu0
  %v754 = vpop.f32.mrf.mxu0
  %v755 = vadd.f32 0.0, %v754
  %v756 = vpop.f32.mrf.mxu0
  %757 = vmatprep.mubr.bf16.mxu0 0
  %758 = vmatmul.mubr.bf16.gmra.mxu0 %v631
  %v759 = vpop.f32.mrf.mxu0
  %v760 = vadd.f32 0.0, %v759
  %v761 = vpop.f32.mrf.mxu0
  %v762 = vpop.f32.mrf.mxu0
  %v763 = vadd.f32 0.0, %v762
  %v764 = vpop.f32.mrf.mxu0
  %765 = vmatprep.mubr.bf16.mxu0 0
  %766 = vmatmul.mubr.bf16.gmra.mxu0 %v634
  %v767 = vpop.f32.mrf.mxu0
  %v768 = vadd.f32 0.0, %v767
  %v769 = vpop.f32.mrf.mxu0
  %v770 = vpop.f32.mrf.mxu0
  %v771 = vadd.f32 0.0, %v770
  %v772 = vpop.f32.mrf.mxu0
  %773 = vdwg.mxu0
  %v774 = vld [vmem:[%s238] sm:$0xf]
  %v775 = vld [vmem:[%s238 + $0x4] sm:$0xf]
  %v778 = vunpack.c.l.b16 %v774
  %v779 = vunpack.c.l.b16 %v775
  %v780 = vpack.c.b16 %v779, %v778
  %782 = vmatprep.subr.bf16.mxu0 0
  %783 = vmatpush1.bf16.msra.mxu0 0
  %784 = vmatprep.subr.bf16.mxu0 0
  %785 = vmatpush1.bf16.msra.mxu0 0
  %786 = vmatprep.subr.bf16.mxu0 0
  %787 = vmatpush1.bf16.msra.mxu0 0
  %788 = vmatprep.subr.bf16.mxu0 0
  %789 = vmatpush1.bf16.msra.mxu0 0
  %790 = vmatprep.subr.bf16.mxu0 0
  %791 = vmatpush1.bf16.msra.mxu0 0
  %792 = vmatprep.subr.bf16.mxu0 0
  %793 = vmatpush1.bf16.msra.mxu0 0
  %794 = vmatprep.subr.bf16.mxu0 0
  %795 = vmatpush1.bf16.msra.mxu0 0
  %796 = vmatprep.subr.bf16.mxu0 0
  %797 = vmatpush1.bf16.msra.mxu0 %v780
  %798 = vmatprep.subr.bf16.mxu0 0
  %799 = vmatpush2.bf16.msra.mxu0 0
  %800 = vmatprep.subr.bf16.mxu0 0
  %801 = vmatpush2.bf16.msra.mxu0 0
  %802 = vmatprep.subr.bf16.mxu0 0
  %803 = vmatpush2.bf16.msra.mxu0 0
  %804 = vmatprep.subr.bf16.mxu0 0
  %805 = vmatpush2.bf16.msra.mxu0 0
  %806 = vmatprep.subr.bf16.mxu0 0
  %807 = vmatpush2.bf16.msra.mxu0 0
  %808 = vmatprep.subr.bf16.mxu0 0
  %809 = vmatpush2.bf16.msra.mxu0 0
  %810 = vmatprep.subr.bf16.mxu0 0
  %811 = vmatpush2.bf16.msra.mxu0 0
  %812 = vmatprep.subr.bf16.mxu0 0
  %813 = vmatpush2.bf16.msra.mxu0 0
  %814 = vmatprep.mubr.bf16.mxu0 0
  %815 = vmatmul.mubr.bf16.gmra.mxu0 %v625
  %v816 = vpop.f32.mrf.mxu0
  %v817 = vadd.f32 0.0, %v816
  %v818 = vpop.f32.mrf.mxu0
  %v819 = vpop.f32.mrf.mxu0
  %v820 = vadd.f32 0.0, %v819
  %v821 = vpop.f32.mrf.mxu0
  %822 = vmatprep.mubr.bf16.mxu0 0
  %823 = vmatmul.mubr.bf16.gmra.mxu0 %v628
  %v824 = vpop.f32.mrf.mxu0
  %v825 = vadd.f32 0.0, %v824
  %v826 = vpop.f32.mrf.mxu0
  %v827 = vpop.f32.mrf.mxu0
  %v828 = vadd.f32 0.0, %v827
  %v829 = vpop.f32.mrf.mxu0
  %830 = vmatprep.mubr.bf16.mxu0 0
  %831 = vmatmul.mubr.bf16.gmra.mxu0 %v631
  %v832 = vpop.f32.mrf.mxu0
  %v833 = vadd.f32 0.0, %v832
  %v834 = vpop.f32.mrf.mxu0
  %v835 = vpop.f32.mrf.mxu0
  %v836 = vadd.f32 0.0, %v835
  %v837 = vpop.f32.mrf.mxu0
  %838 = vmatprep.mubr.bf16.mxu0 0
  %839 = vmatmul.mubr.bf16.gmra.mxu0 %v634
  %v840 = vpop.f32.mrf.mxu0
  %v841 = vadd.f32 0.0, %v840
  %v842 = vpop.f32.mrf.mxu0
  %v843 = vpop.f32.mrf.mxu0
  %v844 = vadd.f32 0.0, %v843
  %v845 = vpop.f32.mrf.mxu0
  %846 = vdwg.mxu0
  %847 = vmatprep.subr.mxu0 0.0
  %848 = vmatpush1.msra.mxu0 %v771
  %849 = vmatprep.subr.mxu0 0.0
  %850 = vmatpush1.msra.mxu0 %v768
  %851 = vmatprep.subr.mxu0 0.0
  %852 = vmatpush1.msra.mxu0 %v763
  %853 = vmatprep.subr.mxu0 0.0
  %854 = vmatpush1.msra.mxu0 %v760
  %855 = vmatprep.subr.mxu0 0.0
  %856 = vmatpush1.msra.mxu0 %v755
  %857 = vmatprep.subr.mxu0 0.0
  %858 = vmatpush1.msra.mxu0 %v752
  %859 = vmatprep.subr.mxu0 0.0
  %860 = vmatpush1.msra.mxu0 %v747
  %861 = vmatprep.subr.mxu0 0.0
  %862 = vmatpush1.msra.mxu0 %v744
  %863 = vmatprep.subr.mxu0 0.0
  %864 = vmatpush1.msra.mxu0 %v698
  %865 = vmatprep.subr.mxu0 0.0
  %866 = vmatpush1.msra.mxu0 %v695
  %867 = vmatprep.subr.mxu0 0.0
  %868 = vmatpush1.msra.mxu0 %v690
  %869 = vmatprep.subr.mxu0 0.0
  %870 = vmatpush1.msra.mxu0 %v687
  %871 = vmatprep.subr.mxu0 0.0
  %872 = vmatpush1.msra.mxu0 %v682
  %873 = vmatprep.subr.mxu0 0.0
  %874 = vmatpush1.msra.mxu0 %v679
  %875 = vmatprep.subr.mxu0 0.0
  %876 = vmatpush1.msra.mxu0 %v674
  %877 = vmatprep.subr.mxu0 0.0
  %878 = vmatpush1.msra.mxu0 %v671
  %879 = vmatprep.subr.mxu0 0.0
  %880 = vmatpush2.msra.mxu0 0.0
  %881 = vmatprep.subr.mxu0 0.0
  %882 = vmatpush2.msra.mxu0 0.0
  %883 = vmatprep.subr.mxu0 0.0
  %884 = vmatpush2.msra.mxu0 0.0
  %885 = vmatprep.subr.mxu0 0.0
  %886 = vmatpush2.msra.mxu0 0.0
  %887 = vmatprep.subr.mxu0 0.0
  %888 = vmatpush2.msra.mxu0 0.0
  %889 = vmatprep.subr.mxu0 0.0
  %890 = vmatpush2.msra.mxu0 0.0
  %891 = vmatprep.subr.mxu0 0.0
  %892 = vmatpush2.msra.mxu0 0.0
  %893 = vmatprep.subr.mxu0 0.0
  %894 = vmatpush2.msra.mxu0 0.0
  %895 = vmatprep.subr.mxu0 0.0
  %896 = vmatpush2.msra.mxu0 %v844
  %897 = vmatprep.subr.mxu0 0.0
  %898 = vmatpush2.msra.mxu0 %v841
  %899 = vmatprep.subr.mxu0 0.0
  %900 = vmatpush2.msra.mxu0 %v836
  %901 = vmatprep.subr.mxu0 0.0
  %902 = vmatpush2.msra.mxu0 %v833
  %903 = vmatprep.subr.mxu0 0.0
  %904 = vmatpush2.msra.mxu0 %v828
  %905 = vmatprep.subr.mxu0 0.0
  %906 = vmatpush2.msra.mxu0 %v825
  %907 = vmatprep.subr.mxu0 0.0
  %908 = vmatpush2.msra.mxu0 %v820
  %909 = vmatprep.subr.mxu0 0.0
  %910 = vmatpush2.msra.mxu0 %v817
  %911 = vmatprep.mubr.f32.mxu0 %v394
  %912 = vmatmul.mubr.f32.gmra.mxu0 %v18
  %v913 = vpop.f32.mrf.mxu0
  %v914 = vadd.f32 %v315, %v913
  %v915 = vpop.f32.mrf.mxu0
  %916 = vmatprep.mubr.f32.mxu0 %v397
  %917 = vmatmul.mubr.f32.gmra.mxu0 %v20
  %v918 = vpop.f32.mrf.mxu0
  %v919 = vadd.f32 %v320, %v918
  %v920 = vpop.f32.mrf.mxu0
  %921 = vmatprep.mubr.f32.mxu0 %v400
  %922 = vmatmul.mubr.f32.gmra.mxu0 %v22
  %v923 = vpop.f32.mrf.mxu0
  %v924 = vadd.f32 %v325, %v923
  %v925 = vpop.f32.mrf.mxu0
  %926 = vmatprep.mubr.f32.mxu0 %v403
  %927 = vmatmul.mubr.f32.gmra.mxu0 %v24
  %v928 = vpop.f32.mrf.mxu0
  %v929 = vadd.f32 %v330, %v928
  %v930 = vpop.f32.mrf.mxu0
  %931 = vmatprep.mubr.f32.mxu0 %v406
  %932 = vmatmul.mubr.f32.gmra.mxu0 %v26
  %v933 = vpop.f32.mrf.mxu0
  %v934 = vadd.f32 %v335, %v933
  %v935 = vpop.f32.mrf.mxu0
  %936 = vmatprep.mubr.f32.mxu0 %v409
  %937 = vmatmul.mubr.f32.gmra.mxu0 %v28
  %v938 = vpop.f32.mrf.mxu0
  %v939 = vadd.f32 %v340, %v938
  %v940 = vpop.f32.mrf.mxu0
  %941 = vmatprep.mubr.f32.mxu0 %v412
  %942 = vmatmul.mubr.f32.gmra.mxu0 %v30
  %v943 = vpop.f32.mrf.mxu0
  %v944 = vadd.f32 %v345, %v943
  %v945 = vpop.f32.mrf.mxu0
  %946 = vmatprep.mubr.f32.mxu0 %v415
  %947 = vmatmul.mubr.f32.gmra.mxu0 %v32
  %v948 = vpop.f32.mrf.mxu0
  %v949 = vadd.f32 %v350, %v948
  %v950 = vpop.f32.mrf.mxu0
  %951 = vmatprep.mubr.f32.mxu0 %v418
  %952 = vmatmul.mubr.f32.gmra.mxu0 %v34
  %v953 = vpop.f32.mrf.mxu0
  %v954 = vadd.f32 %v355, %v953
  %v955 = vpop.f32.mrf.mxu0
  %956 = vmatprep.mubr.f32.mxu0 %v421
  %957 = vmatmul.mubr.f32.gmra.mxu0 %v36
  %v958 = vpop.f32.mrf.mxu0
  %v959 = vadd.f32 %v360, %v958
  %v960 = vpop.f32.mrf.mxu0
  %961 = vmatprep.mubr.f32.mxu0 %v424
  %962 = vmatmul.mubr.f32.gmra.mxu0 %v38
  %v963 = vpop.f32.mrf.mxu0
  %v964 = vadd.f32 %v365, %v963
  %v965 = vpop.f32.mrf.mxu0
  %966 = vmatprep.mubr.f32.mxu0 %v427
  %967 = vmatmul.mubr.f32.gmra.mxu0 %v40
  %v968 = vpop.f32.mrf.mxu0
  %v969 = vadd.f32 %v370, %v968
  %v970 = vpop.f32.mrf.mxu0
  %971 = vmatprep.mubr.f32.mxu0 %v430
  %972 = vmatmul.mubr.f32.gmra.mxu0 %v42
  %v973 = vpop.f32.mrf.mxu0
  %v974 = vadd.f32 %v375, %v973
  %v975 = vpop.f32.mrf.mxu0
  %976 = vmatprep.mubr.f32.mxu0 %v433
  %977 = vmatmul.mubr.f32.gmra.mxu0 %v44
  %v978 = vpop.f32.mrf.mxu0
  %v979 = vadd.f32 %v380, %v978
  %v980 = vpop.f32.mrf.mxu0
  %981 = vmatprep.mubr.f32.mxu0 %v436
  %982 = vmatmul.mubr.f32.gmra.mxu0 %v46
  %v983 = vpop.f32.mrf.mxu0
  %v984 = vadd.f32 %v385, %v983
  %v985 = vpop.f32.mrf.mxu0
  %986 = vmatprep.mubr.f32.mxu0 %v439
  %987 = vmatmul.mubr.f32.gmra.mxu0 %v48
  %v988 = vpop.f32.mrf.mxu0
  %v989 = vadd.f32 %v390, %v988
  %v990 = vpop.f32.mrf.mxu0
  %991 = vdwg.mxu0
  %s992 = scalar_lea.vmem %s4, 128
  %993 = vst.msk [vmem:[%s992] sm:$0xff] %vm586, %v914
  %994 = vst.msk [vmem:[%s992 + $0x8] sm:$0xff] %vm586, %v919
  %995 = vst.msk [vmem:[%s992 + $0x10] sm:$0xff] %vm586, %v924
  %996 = vst.msk [vmem:[%s992 + $0x18] sm:$0xff] %vm586, %v929
  %997 = vst.msk [vmem:[%s992 + $0x20] sm:$0xff] %vm586, %v934
  %998 = vst.msk [vmem:[%s992 + $0x28] sm:$0xff] %vm586, %v939
  %999 = vst.msk [vmem:[%s992 + $0x30] sm:$0xff] %vm586, %v944
  %1000 = vst.msk [vmem:[%s992 + $0x38] sm:$0xff] %vm586, %v949
  %1001 = vst.msk [vmem:[%s992 + $0x40] sm:$0xff] %vm586, %v954
  %1002 = vst.msk [vmem:[%s992 + $0x48] sm:$0xff] %vm586, %v959
  %1003 = vst.msk [vmem:[%s992 + $0x50] sm:$0xff] %vm586, %v964
  %1004 = vst.msk [vmem:[%s992 + $0x58] sm:$0xff] %vm586, %v969
  %1005 = vst.msk [vmem:[%s992 + $0x60] sm:$0xff] %vm586, %v974
  %1006 = vst.msk [vmem:[%s992 + $0x68] sm:$0xff] %vm586, %v979
  %1007 = vst.msk [vmem:[%s992 + $0x70] sm:$0xff] %vm586, %v984
  %1008 = vst.msk [vmem:[%s992 + $0x78] sm:$0xff] %vm586, %v989
  // Predicated region
  $region18: #{tpu_custom_call.1} parent=0 // pred_check
    _
  $region19: #{tpu_custom_call.1} parent=0 // pred_check_branch
    %1010 = sbr.rel (0) target = $region21
  $region20: #{tpu_custom_call.1} parent=0 // pred_region
    _
  $region21: #{tpu_custom_call.1} parent=0 // pred_fallthru
    _
  // Predicated region
  $region22: #{tpu_custom_call.1} parent=0 // pred_check
    _
  $region23: #{tpu_custom_call.1} parent=0 // pred_check_branch
    %1012 = sbr.rel (0) target = $region25
  $region24: #{tpu_custom_call.1} parent=0 // pred_region
    _
  $region25: #{tpu_custom_call.1} parent=0 // pred_fallthru
    _

</llo_original>
